<compile_context>
chip_gen: v7x
topology: tpu7x:2x2x1
jax: 0.10.0
libtpu: 0.0.40
codegen_flags: <defaults>
</compile_context>

<pallas_src>
import functools

import jax
import jax.numpy as jnp
from jax.experimental import pallas as pl
from jax.experimental.pallas import tpu as pltpu


# ----------------------------- Pallas kernel --------------------------------
def _cubemap_kernel(d_ref, tex_ref, failv_ref, out_ref, *, L, C, interp_id):
    # d_ref    : [3, TB]     f32   directions (rows = x/y/z, lanes = batch)
    # tex_ref  : [C*L, 6*L]  bf16  texture, row index = c*L + col, column index = f*L + r
    # failv_ref: [C, 1]      f32
    # out_ref  : [C, TB]     f32   lane-dense output tile
    d = d_ref[...]
    x = d[0:1, :]
    y = d[1:2, :]
    z = d[2:3, :]
    TB = d.shape[1]

    ax, ay, az = jnp.abs(x), jnp.abs(y), jnp.abs(z)

    # --- face selection (OpenGL convention: +x,-x,+y,-y,+z,-z -> 0..5) ---
    # TODO(synk): verify exact tie-breaking (ax==ay / ax==az) against the CUDA backend.
    is_x = (ax >= ay) & (ax >= az)
    is_y = jnp.logical_and(jnp.logical_not(is_x), ay >= az)

    ma = jnp.where(is_x, ax, jnp.where(is_y, ay, az))
    fail = ma <= jnp.float32(0.0)              # degenerate direction -> fail_value
    ma_safe = jnp.where(fail, jnp.float32(1.0), ma)
    # One exact reciprocal reused for both u and v (2 divides -> 1 divide + 2 muls).
    # approx=True EUP reciprocal is deliberately NOT used: its ~1e-3 relative error can move a
    # sample across a texel boundary and change the bilinear taps vs. the exact-divide reference.
    inv_ma = jnp.float32(1.0) / ma_safe

    face = jnp.where(
        is_x, jnp.where(x > 0, 0, 1),
        jnp.where(is_y, jnp.where(y > 0, 2, 3),
                  jnp.where(z > 0, 4, 5))).astype(jnp.int32)
    sc = jnp.where(
        is_x, jnp.where(x > 0, -z, z),
        jnp.where(is_y, x, jnp.where(z > 0, x, -x)))
    tc = jnp.where(
        is_x, -y,
        jnp.where(is_y, jnp.where(y > 0, z, -z), -y))

    u = 0.5 * (sc * inv_ma + 1.0)              # column coordinate in [0, 1]
    v = 0.5 * (tc * inv_ma + 1.0)              # row coordinate in [0, 1]

    Lf = jnp.float32(L)
    r_iota = jax.lax.broadcasted_iota(jnp.int32, (6 * L, TB), 0)   # row ids f*L + r
    c_iota = jax.lax.broadcasted_iota(jnp.int32, (L, TB), 0)       # column ids

    if interp_id == 0:                         # nearest
        ix = jnp.clip(jnp.floor(u * Lf).astype(jnp.int32), 0, L - 1)
        iy = jnp.clip(jnp.floor(v * Lf).astype(jnp.int32), 0, L - 1)
        rw = (r_iota == face * L + iy).astype(jnp.bfloat16)          # [6L, TB] (0/1 exact in bf16)
        cw = (c_iota == ix).astype(jnp.float32)                      # [L, TB]
    else:                                      # (bi)linear, texel-center convention
        fu = u * Lf - 0.5
        fv = v * Lf - 0.5
        x0 = jnp.floor(fu)
        y0 = jnp.floor(fv)
        wx = fu - x0
        wy = fv - y0
        x0i = x0.astype(jnp.int32)
        y0i = y0.astype(jnp.int32)
        # TODO(synk): enable_seamless=1 should wrap taps across adjacent cube faces at
        # texture edges; clamp-to-edge is used here instead.
        x0c = jnp.clip(x0i, 0, L - 1)
        x1c = jnp.clip(x0i + 1, 0, L - 1)
        y0c = jnp.clip(y0i, 0, L - 1)
        y1c = jnp.clip(y0i + 1, 0, L - 1)
        rw = (jnp.where(r_iota == face * L + y0c, 1.0 - wy, 0.0) +
              jnp.where(r_iota == face * L + y1c, wy, 0.0)).astype(jnp.bfloat16)   # [6L, TB]
        cw = (jnp.where(c_iota == x0c, 1.0 - wx, 0.0) +
              jnp.where(c_iota == x1c, wx, 0.0))                                   # [L, TB] f32

    # Row stage (MXU, bf16 x bf16 -> f32 accumulation):
    #   m1[c*L + col, b] = sum_{f,r} tex[f, c, r, col] * rw[f*L + r, b]
    # TODO(synk): for large L (>=128) the dense [6L, TB] contraction and the VMEM-resident
    # texture stop scaling; switch to a scalar-prefetch / DMA-gather formulation there.
    m1 = jnp.dot(tex_ref[...], rw, preferred_element_type=jnp.float32)   # [C*L, TB] f32

    # Column stage: reshape-and-reduce. Splits the sublane axis on an L(=multiple of 8)
    # boundary, applies the column weights on the VPU, then does a sublane-axis sum.
    out = (m1.reshape(C, L, TB) * cw[None, :, :]).sum(axis=1)            # [C, TB]

    out_ref[...] = jnp.where(fail, failv_ref[...], out)


# ------------------------------- wrapper -------------------------------------
def _pick_batch_tile(B_pad, tile_b):
    """Largest multiple of 128 that divides B_pad and is <= tile_b; keep >=2 grid steps
    when B_pad >= 256 so a 2-TensorCore chip (v7x) can shard the batch axis."""
    best = 128
    d = 128
    limit = min(B_pad, max(tile_b, 128))
    while d <= limit:
        if B_pad % d == 0:
            best = d
        d += 128
    if B_pad >= 256 and best == B_pad:
        d = best - 128
        while d >= 128:
            if B_pad % d == 0:
                return d
            d -= 128
    return best


def cubemap_encode(dirs, texture, failv, interpolation="linear", tile_b=1024):
    """Pallas cubemap encode. dirs: [B,3], texture: [6,C,L,L], failv: [C] -> [B,C]."""
    dirs = dirs.astype(jnp.float32)
    texture = texture.astype(jnp.float32)
    failv = failv.astype(jnp.float32)

    B = dirs.shape[0]
    n_faces, C, L, L2 = texture.shape
    assert n_faces == 6 and L == L2

    # Batch lives on the lane axis: pad to a multiple of 128 and pick a lane-dense tile.
    B_pad = ((B + 127) // 128) * 128
    TB = _pick_batch_tile(B_pad, tile_b)

    # Glue (plain JAX, outside the kernel): transpose/pad dirs, reorder + bf16-cast texture.
    dirs_t = jnp.transpose(dirs)                       # [3, B]
    if B_pad != B:
        dirs_t = jnp.pad(dirs_t, ((0, 0), (0, B_pad - B)))   # padded dirs take the fail path

    # texture[f, c, r, col] -> T2[c*L + col, f*L + r], cast to bf16 for the MXU row stage.
    tex2 = jnp.transpose(texture, (1, 3, 0, 2)).reshape(C * L, 6 * L).astype(jnp.bfloat16)
    failv2 = failv.reshape(C, 1)

    interp_id = {"nearest": 0, "linear": 1, 0: 0, 1: 1}[interpolation]
    kernel = functools.partial(_cubemap_kernel, L=L, C=C, interp_id=interp_id)

    # Note: texture / failv blocks are grid-invariant; at these shapes the default
    # double-buffering overhead is negligible (a pl.Buffered(1) pipeline_mode would
    # halve resident texture VMEM as L grows).
    out_cb = pl.pallas_call(
        kernel,
        out_shape=jax.ShapeDtypeStruct((C, B_pad), jnp.float32),
        grid_spec=pltpu.PrefetchScalarGridSpec(
            num_scalar_prefetch=0,
            grid=(B_pad // TB,),
            in_specs=[
                pl.BlockSpec((3, TB), lambda i: (0, i)),           # directions
                pl.BlockSpec((C * L, 6 * L), lambda i: (0, 0)),    # texture (grid-invariant)
                pl.BlockSpec((C, 1), lambda i: (0, 0)),            # fail value (resident)
            ],
            out_specs=pl.BlockSpec((C, TB), lambda i: (0, i)),     # lane-dense [C, TB] tile
        ),
        compiler_params=pltpu.CompilerParams(
            dimension_semantics=("parallel",),
        ),
    )(dirs_t, tex2, failv2)

    # Module's forward() returns outputs.permute(1, 0) -> [B, C]
    return jnp.transpose(out_cb)[:B]


# ------------------------- pure-JAX reference --------------------------------
def cubemap_encode_ref(dirs, texture, failv, interpolation="linear"):
    dirs = dirs.astype(jnp.float32)
    _, C, L, _ = texture.shape
    x, y, z = dirs[:, 0:1], dirs[:, 1:2], dirs[:, 2:3]
    ax, ay, az = jnp.abs(x), jnp.abs(y), jnp.abs(z)
    is_x = (ax >= ay) & (ax >= az)
    is_y = (~is_x) & (ay >= az)
    ma = jnp.where(is_x, ax, jnp.where(is_y, ay, az))
    fail = ma <= 0.0
    ma_safe = jnp.where(fail, 1.0, ma)
    face = jnp.where(is_x, jnp.where(x > 0, 0, 1),
                     jnp.where(is_y, jnp.where(y > 0, 2, 3),
                               jnp.where(z > 0, 4, 5))).astype(jnp.int32)
    sc = jnp.where(is_x, jnp.where(x > 0, -z, z),
                   jnp.where(is_y, x, jnp.where(z > 0, x, -x)))
    tc = jnp.where(is_x, -y, jnp.where(is_y, jnp.where(y > 0, z, -z), -y))
    u = 0.5 * (sc / ma_safe + 1.0)
    v = 0.5 * (tc / ma_safe + 1.0)
    tex_flat = jnp.transpose(texture, (0, 2, 3, 1)).reshape(6 * L * L, C)
    if interpolation == "nearest":
        ix = jnp.clip(jnp.floor(u * L).astype(jnp.int32), 0, L - 1)
        iy = jnp.clip(jnp.floor(v * L).astype(jnp.int32), 0, L - 1)
        corners = [(iy, ix, jnp.ones_like(u))]
    else:
        fu = u * L - 0.5
        fv = v * L - 0.5
        x0 = jnp.floor(fu)
        y0 = jnp.floor(fv)
        wx, wy = fu - x0, fv - y0
        x0i, y0i = x0.astype(jnp.int32), y0.astype(jnp.int32)
        x0c, x1c = jnp.clip(x0i, 0, L - 1), jnp.clip(x0i + 1, 0, L - 1)
        y0c, y1c = jnp.clip(y0i, 0, L - 1), jnp.clip(y0i + 1, 0, L - 1)
        corners = [(y0c, x0c, (1 - wy) * (1 - wx)), (y0c, x1c, (1 - wy) * wx),
                   (y1c, x0c, wy * (1 - wx)), (y1c, x1c, wy * wx)]
    out = jnp.zeros((dirs.shape[0], C), jnp.float32)
    for iy, ix, w in corners:
        idx = (face * (L * L) + iy * L + ix)[:, 0]
        out = out + w * tex_flat[idx]
    return jnp.where(fail, failv[None, :], out)


# --------------------------------- main ---------------------------------------
if __name__ == "__main__":
    import numpy as np

    key = jax.random.PRNGKey(0)
    k1, k2 = jax.random.split(key)

    B, C, L = 128, 8, 16          # small shapes: batch=128 dirs, output_dim=8, resolution=16

    # Deterministic parameter init, shapes as in CubemapEncoder.__init__
    texture = jax.random.uniform(k2, (6, C, L, L), dtype=jnp.float32) * 10.0 - 5.0
    failv = jnp.zeros((C,), dtype=jnp.float32)

    # Inputs: direction vectors [B, 3]; row 0 is degenerate to exercise fail_value path.
    dirs = jax.random.normal(k1, (B, 3), dtype=jnp.float32)
    dirs = dirs.at[0].set(jnp.zeros((3,), jnp.float32))

    out = cubemap_encode(dirs, texture, failv, interpolation="linear")
    out = jax.block_until_ready(out)
    ref = cubemap_encode_ref(dirs, texture, failv, interpolation="linear")
    assert out.shape == (B, C) and out.dtype == jnp.float32
    np.testing.assert_allclose(np.asarray(out), np.asarray(ref), rtol=5e-2, atol=5e-2)

    out_n = cubemap_encode(dirs, texture, failv, interpolation="nearest")
    out_n = jax.block_until_ready(out_n)
    ref_n = cubemap_encode_ref(dirs, texture, failv, interpolation="nearest")
    np.testing.assert_allclose(np.asarray(out_n), np.asarray(ref_n), rtol=5e-2, atol=5e-2)

    print("KERNEL_OK")
</pallas_src>

<mosaic_0001>
module attributes {stable_mosaic.version = 11 : i64} {
  func.func @_cubemap_kernel(%arg0: i32, %arg1: memref<3x128xf32, #tpu.memory_space<vmem>>, %arg2: memref<128x96xbf16, #tpu.memory_space<vmem>>, %arg3: memref<8x1xf32, #tpu.memory_space<vmem>>, %arg4: memref<8x128xf32, #tpu.memory_space<vmem>>) attributes {dimension_semantics = [#tpu.dimension_semantics<parallel>], iteration_bounds = array<i64: 1>, scalar_prefetch = 0 : i64, scratch_operands = 0 : i64, tpu.core_type = #tpu.core_type<tc>, window_params = [{transform_indices = @transform_0, window_bounds = array<i64: 3, 128>}, {pipeline_mode = #tpu.pipeline_mode<synchronous>, transform_indices = @transform_1, window_bounds = array<i64: 128, 96>}, {pipeline_mode = #tpu.pipeline_mode<synchronous>, transform_indices = @transform_2, window_bounds = array<i64: 8, 1>}, {transform_indices = @transform_3, window_bounds = array<i64: 8, 128>}]} {
    %c0 = arith.constant 0 : index
    %c0_0 = arith.constant 0 : index
    %0 = vector.load %arg1[%c0, %c0_0] : memref<3x128xf32, #tpu.memory_space<vmem>>, vector<3x128xf32>
    %1 = vector.extract_strided_slice %0 {offsets = [0, 0], sizes = [1, 128], strides = [1, 1]} : vector<3x128xf32> to vector<1x128xf32>
    %2 = vector.extract_strided_slice %0 {offsets = [1, 0], sizes = [1, 128], strides = [1, 1]} : vector<3x128xf32> to vector<1x128xf32>
    %3 = vector.extract_strided_slice %0 {offsets = [2, 0], sizes = [1, 128], strides = [1, 1]} : vector<3x128xf32> to vector<1x128xf32>
    %4 = math.absf %1 : vector<1x128xf32>
    %5 = math.absf %2 : vector<1x128xf32>
    %6 = math.absf %3 : vector<1x128xf32>
    %7 = arith.cmpf oge, %4, %5 : vector<1x128xf32>
    %8 = arith.cmpf oge, %4, %6 : vector<1x128xf32>
    %9 = arith.andi %7, %8 : vector<1x128xi1>
    %cst = arith.constant dense<true> : vector<1x128xi1>
    %10 = arith.xori %9, %cst : vector<1x128xi1>
    %11 = arith.cmpf oge, %5, %6 : vector<1x128xf32>
    %12 = arith.andi %10, %11 : vector<1x128xi1>
    %13 = arith.select %12, %5, %6 : vector<1x128xi1>, vector<1x128xf32>
    %14 = arith.select %9, %4, %13 : vector<1x128xi1>, vector<1x128xf32>
    %cst_1 = arith.constant 0.000000e+00 : f32
    %15 = vector.broadcast %cst_1 : f32 to vector<1x128xf32>
    %16 = arith.cmpf ole, %14, %15 : vector<1x128xf32>
    %cst_2 = arith.constant 1.000000e+00 : f32
    %17 = vector.broadcast %cst_2 : f32 to vector<1x128xf32>
    %18 = arith.select %16, %17, %14 : vector<1x128xi1>, vector<1x128xf32>
    %cst_3 = arith.constant 1.000000e+00 : f32
    %19 = vector.broadcast %cst_3 : f32 to vector<1x128xf32>
    %20 = arith.divf %19, %18 : vector<1x128xf32>
    %cst_4 = arith.constant 0.000000e+00 : f32
    %21 = vector.broadcast %cst_4 : f32 to vector<1x128xf32>
    %22 = arith.cmpf ogt, %1, %21 : vector<1x128xf32>
    %c0_i32 = arith.constant 0 : i32
    %c1_i32 = arith.constant 1 : i32
    %23 = vector.broadcast %c0_i32 : i32 to vector<1x128xi32>
    %24 = vector.broadcast %c1_i32 : i32 to vector<1x128xi32>
    %25 = arith.select %22, %23, %24 : vector<1x128xi1>, vector<1x128xi32>
    %cst_5 = arith.constant 0.000000e+00 : f32
    %26 = vector.broadcast %cst_5 : f32 to vector<1x128xf32>
    %27 = arith.cmpf ogt, %2, %26 : vector<1x128xf32>
    %c2_i32 = arith.constant 2 : i32
    %c3_i32 = arith.constant 3 : i32
    %28 = vector.broadcast %c2_i32 : i32 to vector<1x128xi32>
    %29 = vector.broadcast %c3_i32 : i32 to vector<1x128xi32>
    %30 = arith.select %27, %28, %29 : vector<1x128xi1>, vector<1x128xi32>
    %cst_6 = arith.constant 0.000000e+00 : f32
    %31 = vector.broadcast %cst_6 : f32 to vector<1x128xf32>
    %32 = arith.cmpf ogt, %3, %31 : vector<1x128xf32>
    %c4_i32 = arith.constant 4 : i32
    %c5_i32 = arith.constant 5 : i32
    %33 = vector.broadcast %c4_i32 : i32 to vector<1x128xi32>
    %34 = vector.broadcast %c5_i32 : i32 to vector<1x128xi32>
    %35 = arith.select %32, %33, %34 : vector<1x128xi1>, vector<1x128xi32>
    %36 = arith.select %12, %30, %35 : vector<1x128xi1>, vector<1x128xi32>
    %37 = arith.select %9, %25, %36 : vector<1x128xi1>, vector<1x128xi32>
    %cst_7 = arith.constant 0.000000e+00 : f32
    %38 = vector.broadcast %cst_7 : f32 to vector<1x128xf32>
    %39 = arith.cmpf ogt, %1, %38 : vector<1x128xf32>
    %cst_8 = arith.constant 0.000000e+00 : f32
    %40 = vector.broadcast %cst_8 : f32 to vector<1x128xf32>
    %41 = arith.subf %40, %3 : vector<1x128xf32>
    %42 = arith.select %39, %41, %3 : vector<1x128xi1>, vector<1x128xf32>
    %cst_9 = arith.constant 0.000000e+00 : f32
    %43 = vector.broadcast %cst_9 : f32 to vector<1x128xf32>
    %44 = arith.cmpf ogt, %3, %43 : vector<1x128xf32>
    %cst_10 = arith.constant 0.000000e+00 : f32
    %45 = vector.broadcast %cst_10 : f32 to vector<1x128xf32>
    %46 = arith.subf %45, %1 : vector<1x128xf32>
    %47 = arith.select %44, %1, %46 : vector<1x128xi1>, vector<1x128xf32>
    %48 = arith.select %12, %1, %47 : vector<1x128xi1>, vector<1x128xf32>
    %49 = arith.select %9, %42, %48 : vector<1x128xi1>, vector<1x128xf32>
    %cst_11 = arith.constant 0.000000e+00 : f32
    %50 = vector.broadcast %cst_11 : f32 to vector<1x128xf32>
    %51 = arith.subf %50, %2 : vector<1x128xf32>
    %cst_12 = arith.constant 0.000000e+00 : f32
    %52 = vector.broadcast %cst_12 : f32 to vector<1x128xf32>
    %53 = arith.cmpf ogt, %2, %52 : vector<1x128xf32>
    %cst_13 = arith.constant 0.000000e+00 : f32
    %54 = vector.broadcast %cst_13 : f32 to vector<1x128xf32>
    %55 = arith.subf %54, %3 : vector<1x128xf32>
    %56 = arith.select %53, %3, %55 : vector<1x128xi1>, vector<1x128xf32>
    %cst_14 = arith.constant 0.000000e+00 : f32
    %57 = vector.broadcast %cst_14 : f32 to vector<1x128xf32>
    %58 = arith.subf %57, %2 : vector<1x128xf32>
    %59 = arith.select %12, %56, %58 : vector<1x128xi1>, vector<1x128xf32>
    %60 = arith.select %9, %51, %59 : vector<1x128xi1>, vector<1x128xf32>
    %61 = arith.mulf %49, %20 : vector<1x128xf32>
    %cst_15 = arith.constant 1.000000e+00 : f32
    %62 = vector.broadcast %cst_15 : f32 to vector<1x128xf32>
    %63 = arith.addf %61, %62 : vector<1x128xf32>
    %cst_16 = arith.constant 5.000000e-01 : f32
    %64 = vector.broadcast %cst_16 : f32 to vector<1x128xf32>
    %65 = arith.mulf %64, %63 : vector<1x128xf32>
    %66 = arith.mulf %60, %20 : vector<1x128xf32>
    %cst_17 = arith.constant 1.000000e+00 : f32
    %67 = vector.broadcast %cst_17 : f32 to vector<1x128xf32>
    %68 = arith.addf %66, %67 : vector<1x128xf32>
    %cst_18 = arith.constant 5.000000e-01 : f32
    %69 = vector.broadcast %cst_18 : f32 to vector<1x128xf32>
    %70 = arith.mulf %69, %68 : vector<1x128xf32>
    %71 = tpu.iota {dimensions = array<i32: 0>} : vector<96x128xi32>
    %72 = tpu.iota {dimensions = array<i32: 0>} : vector<16x128xi32>
    %cst_19 = arith.constant 1.600000e+01 : f32
    %73 = vector.broadcast %cst_19 : f32 to vector<1x128xf32>
    %74 = arith.mulf %65, %73 : vector<1x128xf32>
    %cst_20 = arith.constant 5.000000e-01 : f32
    %75 = vector.broadcast %cst_20 : f32 to vector<1x128xf32>
    %76 = arith.subf %74, %75 : vector<1x128xf32>
    %cst_21 = arith.constant 1.600000e+01 : f32
    %77 = vector.broadcast %cst_21 : f32 to vector<1x128xf32>
    %78 = arith.mulf %70, %77 : vector<1x128xf32>
    %cst_22 = arith.constant 5.000000e-01 : f32
    %79 = vector.broadcast %cst_22 : f32 to vector<1x128xf32>
    %80 = arith.subf %78, %79 : vector<1x128xf32>
    %81 = math.floor %76 : vector<1x128xf32>
    %82 = math.floor %80 : vector<1x128xf32>
    %83 = arith.subf %76, %81 : vector<1x128xf32>
    %84 = arith.subf %80, %82 : vector<1x128xf32>
    %85 = arith.fptosi %81 : vector<1x128xf32> to vector<1x128xi32>
    %86 = arith.fptosi %82 : vector<1x128xf32> to vector<1x128xi32>
    %c0_i32_23 = arith.constant 0 : i32
    %c15_i32 = arith.constant 15 : i32
    %87 = vector.broadcast %c0_i32_23 : i32 to vector<1x128xi32>
    %88 = arith.maxsi %87, %85 : vector<1x128xi32>
    %89 = vector.broadcast %c15_i32 : i32 to vector<1x128xi32>
    %90 = arith.minsi %89, %88 : vector<1x128xi32>
    %c1_i32_24 = arith.constant 1 : i32
    %91 = vector.broadcast %c1_i32_24 : i32 to vector<1x128xi32>
    %92 = arith.addi %85, %91 : vector<1x128xi32>
    %c0_i32_25 = arith.constant 0 : i32
    %c15_i32_26 = arith.constant 15 : i32
    %93 = vector.broadcast %c0_i32_25 : i32 to vector<1x128xi32>
    %94 = arith.maxsi %93, %92 : vector<1x128xi32>
    %95 = vector.broadcast %c15_i32_26 : i32 to vector<1x128xi32>
    %96 = arith.minsi %95, %94 : vector<1x128xi32>
    %c0_i32_27 = arith.constant 0 : i32
    %c15_i32_28 = arith.constant 15 : i32
    %97 = vector.broadcast %c0_i32_27 : i32 to vector<1x128xi32>
    %98 = arith.maxsi %97, %86 : vector<1x128xi32>
    %99 = vector.broadcast %c15_i32_28 : i32 to vector<1x128xi32>
    %100 = arith.minsi %99, %98 : vector<1x128xi32>
    %c1_i32_29 = arith.constant 1 : i32
    %101 = vector.broadcast %c1_i32_29 : i32 to vector<1x128xi32>
    %102 = arith.addi %86, %101 : vector<1x128xi32>
    %c0_i32_30 = arith.constant 0 : i32
    %c15_i32_31 = arith.constant 15 : i32
    %103 = vector.broadcast %c0_i32_30 : i32 to vector<1x128xi32>
    %104 = arith.maxsi %103, %102 : vector<1x128xi32>
    %105 = vector.broadcast %c15_i32_31 : i32 to vector<1x128xi32>
    %106 = arith.minsi %105, %104 : vector<1x128xi32>
    %c16_i32 = arith.constant 16 : i32
    %107 = vector.broadcast %c16_i32 : i32 to vector<1x128xi32>
    %108 = arith.muli %37, %107 : vector<1x128xi32>
    %109 = arith.addi %108, %100 : vector<1x128xi32>
    %110 = vector.broadcast %109 : vector<1x128xi32> to vector<96x128xi32>
    %111 = arith.cmpi eq, %71, %110 : vector<96x128xi32>
    %cst_32 = arith.constant 1.000000e+00 : f32
    %112 = vector.broadcast %cst_32 : f32 to vector<1x128xf32>
    %113 = arith.subf %112, %84 : vector<1x128xf32>
    %cst_33 = arith.constant 0.000000e+00 : f32
    %114 = vector.shape_cast %113 : vector<1x128xf32> to vector<1x128xf32>
    %115 = vector.broadcast %114 : vector<1x128xf32> to vector<96x128xf32>
    %116 = vector.broadcast %cst_33 : f32 to vector<96x128xf32>
    %117 = arith.select %111, %115, %116 : vector<96x128xi1>, vector<96x128xf32>
    %c16_i32_34 = arith.constant 16 : i32
    %118 = vector.broadcast %c16_i32_34 : i32 to vector<1x128xi32>
    %119 = arith.muli %37, %118 : vector<1x128xi32>
    %120 = arith.addi %119, %106 : vector<1x128xi32>
    %121 = vector.broadcast %120 : vector<1x128xi32> to vector<96x128xi32>
    %122 = arith.cmpi eq, %71, %121 : vector<96x128xi32>
    %cst_35 = arith.constant 0.000000e+00 : f32
    %123 = vector.shape_cast %84 : vector<1x128xf32> to vector<1x128xf32>
    %124 = vector.broadcast %123 : vector<1x128xf32> to vector<96x128xf32>
    %125 = vector.broadcast %cst_35 : f32 to vector<96x128xf32>
    %126 = arith.select %122, %124, %125 : vector<96x128xi1>, vector<96x128xf32>
    %127 = arith.addf %117, %126 : vector<96x128xf32>
    %128 = arith.truncf %127 : vector<96x128xf32> to vector<96x128xbf16>
    %129 = vector.broadcast %90 : vector<1x128xi32> to vector<16x128xi32>
    %130 = arith.cmpi eq, %72, %129 : vector<16x128xi32>
    %cst_36 = arith.constant 1.000000e+00 : f32
    %131 = vector.broadcast %cst_36 : f32 to vector<1x128xf32>
    %132 = arith.subf %131, %83 : vector<1x128xf32>
    %cst_37 = arith.constant 0.000000e+00 : f32
    %133 = vector.shape_cast %132 : vector<1x128xf32> to vector<1x128xf32>
    %134 = vector.broadcast %133 : vector<1x128xf32> to vector<16x128xf32>
    %135 = vector.broadcast %cst_37 : f32 to vector<16x128xf32>
    %136 = arith.select %130, %134, %135 : vector<16x128xi1>, vector<16x128xf32>
    %137 = vector.broadcast %96 : vector<1x128xi32> to vector<16x128xi32>
    %138 = arith.cmpi eq, %72, %137 : vector<16x128xi32>
    %cst_38 = arith.constant 0.000000e+00 : f32
    %139 = vector.shape_cast %83 : vector<1x128xf32> to vector<1x128xf32>
    %140 = vector.broadcast %139 : vector<1x128xf32> to vector<16x128xf32>
    %141 = vector.broadcast %cst_38 : f32 to vector<16x128xf32>
    %142 = arith.select %138, %140, %141 : vector<16x128xi1>, vector<16x128xf32>
    %143 = arith.addf %136, %142 : vector<16x128xf32>
    %c0_39 = arith.constant 0 : index
    %c0_40 = arith.constant 0 : index
    %144 = vector.load %arg2[%c0_39, %c0_40] : memref<128x96xbf16, #tpu.memory_space<vmem>>, vector<128x96xbf16>
    %cst_41 = arith.constant dense<0.000000e+00> : vector<128x128xf32>
    %145 = tpu.matmul %144, %128, %cst_41 {dimension_numbers = #tpu.dot_dimension_numbers<[1], [0], [0], [1], [0, 0, 1, 1], [], []>} : vector<128x96xbf16>, vector<96x128xbf16>, vector<128x128xf32> -> vector<128x128xf32>
    %146 = vector.shape_cast %145 : vector<128x128xf32> to vector<8x16x128xf32>
    %147 = vector.shape_cast %143 : vector<16x128xf32> to vector<1x16x128xf32>
    %148 = vector.broadcast %147 : vector<1x16x128xf32> to vector<8x16x128xf32>
    %149 = arith.mulf %146, %148 : vector<8x16x128xf32>
    %cst_42 = arith.constant dense<0.000000e+00> : vector<8x128xf32>
    %150 = vector.multi_reduction <add>, %149, %cst_42 [1] : vector<8x16x128xf32> to vector<8x128xf32>
    %c0_43 = arith.constant 0 : index
    %c0_44 = arith.constant 0 : index
    %151 = vector.load %arg3[%c0_43, %c0_44] : memref<8x1xf32, #tpu.memory_space<vmem>>, vector<8x1xf32>
    %152 = vector.shape_cast %16 : vector<1x128xi1> to vector<1x128xi1>
    %153 = vector.broadcast %152 : vector<1x128xi1> to vector<8x128xi1>
    %154 = vector.shape_cast %151 : vector<8x1xf32> to vector<8x1xf32>
    %155 = vector.broadcast %154 : vector<8x1xf32> to vector<8x128xf32>
    %156 = arith.select %153, %155, %150 : vector<8x128xi1>, vector<8x128xf32>
    %c0_45 = arith.constant 0 : index
    %c0_46 = arith.constant 0 : index
    %157 = vector.load %arg4[%c0_45, %c0_46] : memref<8x128xf32, #tpu.memory_space<vmem>>, vector<8x128xf32>
    tpu.vector_store %arg4[%c0_45, %c0_46], %156 {strides = array<i32>} : memref<8x128xf32, #tpu.memory_space<vmem>>, vector<8x128xf32>,
    return
  }
  func.func @transform_0(%arg0: i32) -> (i32, i32) {
    %c0_i32 = arith.constant 0 : i32
    %c0_i32_0 = arith.constant 0 : i32
    return %c0_i32, %arg0 : i32, i32
  }
  func.func @transform_1(%arg0: i32) -> (i32, i32) {
    %c0_i32 = arith.constant 0 : i32
    %c0_i32_0 = arith.constant 0 : i32
    %c0_i32_1 = arith.constant 0 : i32
    return %c0_i32, %c0_i32_0 : i32, i32
  }
  func.func @transform_2(%arg0: i32) -> (i32, i32) {
    %c0_i32 = arith.constant 0 : i32
    %c0_i32_0 = arith.constant 0 : i32
    %c0_i32_1 = arith.constant 0 : i32
    return %c0_i32, %c0_i32_0 : i32, i32
  }
  func.func @transform_3(%arg0: i32) -> (i32, i32) {
    %c0_i32 = arith.constant 0 : i32
    %c0_i32_0 = arith.constant 0 : i32
    return %c0_i32, %arg0 : i32, i32
  }
}

</mosaic_0001>

<llo_original>
// kernel: tpu_custom_call.1
$region0: #{tpu_custom_call.1}
  #allocation0 [shape = 'u32[]', space=smem, size = 0x4, offset = 0x4, fixed_abs, tag = 'smem constant byte address 0x4 - core index']
  #allocation1 [shape = 'u32[144,128]{1,0:T(1,128)}', space=vmem, size = 0x12000, scoped, tag = 'internal scratch']
  %s0 = inlined_call_operand.vmem [shape: f32[3,128], index: 0, kind: input, shape index: {}]
  %s1 = inlined_call_operand.vmem [shape: bf16[128,96], index: 1, kind: input, shape index: {}]
  %s2 = inlined_call_operand.vmem [shape: f32[8,1], index: 2, kind: input, shape index: {}]
  %s3 = inlined_call_operand.hbm [shape: f32[8,128], index: 3, kind: output, shape index: {}]
  %s4 = sld [smem:[#allocation0]]
  $region22: #{tpu_custom_call.1} parent=0
    _
  %s6 = ssub.s32 1, %s4
  %s7 = scalar_select 0, %s6, %s4
  $region1: #{tpu_custom_call.1} parent=0
    #allocation2 [shape = 'u8[4096]{0}', space=vmem, size = 0x1000, scoped, tag = 'output window, operand 0, single buffered']
    #allocation3 [shape = 's32[1]{0}', space=sflag, size = 0x4, scoped, tag = 'scoped memory for tpu_custom_call.1']
    %8 = vsyncpa [#allocation3], 0
    // Predicated region
    $region2: #{tpu_custom_call.1} parent=1 // pred_check
      _
    $region3: #{tpu_custom_call.1} parent=1 // pred_check_branch
      %10 = sbr.rel (0) target = $region5
    $region4: #{tpu_custom_call.1} parent=1 // pred_region
      _
    $region5: #{tpu_custom_call.1} parent=1 // pred_fallthru
      _
    // Predicated region
    $region6: #{tpu_custom_call.1} parent=1 // pred_check
      _
    $region7: #{tpu_custom_call.1} parent=1 // pred_check_branch
      %12 = sbr.rel (0) target = $region9
    $region8: #{tpu_custom_call.1} parent=1 // pred_region
      _
    $region9: #{tpu_custom_call.1} parent=1 // pred_fallthru
      _
    // Predicated region
    $region10: #{tpu_custom_call.1} parent=1 // pred_check
      _
    $region11: #{tpu_custom_call.1} parent=1 // pred_check_branch
      %14 = sbr.rel (0) target = $region13
    $region12: #{tpu_custom_call.1} parent=1 // pred_region
      _
    $region13: #{tpu_custom_call.1} parent=1 // pred_fallthru
      _
    %v16 = vld [vmem:[%s0] sm:$0x7]
    %v17 = vand.u32 2147483647, %v16
    %v19 = vrot.slane %v17, 1
    %vm21 = vcmp.ge.f32.partialorder %v17, %v19
    %v22 = vrot.slane %v17, 2
    %vm24 = vcmp.ge.f32.partialorder %v17, %v22
    %vm25 = vmand %vm21, %vm24
    %vm26 = vmxor %vm25, 1
    %v27 = vsel %vm21, 1, 0
    %v28 = vrot.slane %v27, 1
    %vm29 = vcmp.ne.s32.totalorder %v28, 0
    %vm30 = vmand %vm26, %vm29
    %v31 = vsel %vm30, %v19, %v22
    %v32 = vsel %vm25, %v17, %v31
    %vm33 = vcmp.le.f32.partialorder %v32, 0.0
    %v34 = vsel %vm33, 1.0, %v32
    %v35 = vrcp.pop %v34
    %v36 = vmul.f32 1.0, %v35
    %vm37 = vcmp.gt.f32.partialorder %v16, 0.0
    %v38 = vsel %vm37, 0, 1
    %v39 = vsel %vm37, 2, 3
    %v40 = vsel %vm37, 4, 5
    %v41 = vrot.slane %v39, 1
    %v42 = vrot.slane %v40, 2
    %v43 = vsel %vm30, %v41, %v42
    %v44 = vsel %vm25, %v38, %v43
    %v45 = vsub.f32 0.0, %v16
    %v47 = vrot.slane %v45, 2
    %v50 = vrot.slane %v16, 2
    %v52 = vsel %vm37, %v47, %v50
    %v53 = vrot.slane %v16, 6
    %v55 = vrot.slane %v45, 6
    %v57 = vsel %vm37, %v53, %v55
    %v59 = vrot.slane %v57, 2
    %v61 = vsel %vm30, %v16, %v59
    %v62 = vsel %vm25, %v52, %v61
    %v63 = vrot.slane %v16, 1
    %v65 = vrot.slane %v45, 1
    %v67 = vsel %vm37, %v63, %v65
    %v69 = vrot.slane %v67, 1
    %v71 = vsel %vm30, %v69, %v65
    %v72 = vsel %vm25, %v65, %v71
    %v73 = vmul.f32 %v62, %v36
    %v74 = vadd.f32 %v73, 1.0
    %v75 = vmul.f32 %v74, 0.5
    %v76 = vmul.f32 %v72, %v36
    %v77 = vadd.f32 %v76, 1.0
    %v78 = vmul.f32 %v77, 0.5
    %v79 = vlaneseq
    %v80 = vshrl.u32 %v79, 7
    %v81 = vadd.s32 %v80, 8
    %v82 = vadd.s32 %v80, 16
    %v83 = vadd.s32 %v80, 24
    %v84 = vadd.s32 %v80, 32
    %v85 = vadd.s32 %v80, 40
    %v86 = vadd.s32 %v80, 48
    %v87 = vadd.s32 %v80, 56
    %v88 = vadd.s32 %v80, 64
    %v89 = vadd.s32 %v80, 72
    %v90 = vadd.s32 %v80, 80
    %v91 = vadd.s32 %v80, 88
    %v92 = vmul.f32 %v75, 16.0
    %v93 = vsub.f32 %v92, 0.5
    %v94 = vmul.f32 %v78, 16.0
    %v95 = vsub.f32 %v94, 0.5
    %v96 = vfloor.f32 %v93
    %v97 = vfloor.f32 %v95
    %v98 = vsub.f32 %v93, %v96
    %v99 = vsub.f32 %v95, %v97
    %v100 = vcvt.f32.s32.to.zero.pseudo %v96
    %v101 = vcvt.f32.s32.to.zero.pseudo %v97
    %vm102 = vcmp.gt.s32.totalorder %v100, 0
    %v103 = vsel %vm102, %v100, 0
    %vm104 = vcmp.lt.s32.totalorder %v103, 15
    %v105 = vsel %vm104, %v103, 15
    %v106 = vadd.s32 %v100, 1
    %vm107 = vcmp.gt.s32.totalorder %v106, 0
    %v108 = vsel %vm107, %v106, 0
    %vm109 = vcmp.lt.s32.totalorder %v108, 15
    %v110 = vsel %vm109, %v108, 15
    %vm111 = vcmp.gt.s32.totalorder %v101, 0
    %v112 = vsel %vm111, %v101, 0
    %vm113 = vcmp.lt.s32.totalorder %v112, 15
    %v114 = vsel %vm113, %v112, 15
    %v115 = vadd.s32 %v101, 1
    %vm116 = vcmp.gt.s32.totalorder %v115, 0
    %v117 = vsel %vm116, %v115, 0
    %vm118 = vcmp.lt.s32.totalorder %v117, 15
    %v119 = vsel %vm118, %v117, 15
    %v120 = vmul.u32 %v44, 16
    %v121 = vadd.s32 %v120, %v114
    %v122 = vlaneseq
    %v123 = vshrl.u32 %v122, 7
    %v124 = vsub.s32 0, %v123
    %v125 = vrot.slane %v121, %v124
    %vm126 = vcmp.eq.s32.totalorder %v80, %v125
    %vm127 = vcmp.eq.s32.totalorder %v81, %v125
    %vm128 = vcmp.eq.s32.totalorder %v82, %v125
    %vm129 = vcmp.eq.s32.totalorder %v83, %v125
    %vm130 = vcmp.eq.s32.totalorder %v84, %v125
    %vm131 = vcmp.eq.s32.totalorder %v85, %v125
    %vm132 = vcmp.eq.s32.totalorder %v86, %v125
    %vm133 = vcmp.eq.s32.totalorder %v87, %v125
    %vm134 = vcmp.eq.s32.totalorder %v88, %v125
    %vm135 = vcmp.eq.s32.totalorder %v89, %v125
    %vm136 = vcmp.eq.s32.totalorder %v90, %v125
    %vm137 = vcmp.eq.s32.totalorder %v91, %v125
    %v138 = vsub.f32 1.0, %v99
    %v139 = vlaneseq
    %v140 = vshrl.u32 %v139, 7
    %v141 = vsub.s32 0, %v140
    %v142 = vrot.slane %v138, %v141
    %v143 = vsel %vm126, %v142, 0.0
    %v144 = vsel %vm127, %v142, 0.0
    %v145 = vsel %vm128, %v142, 0.0
    %v146 = vsel %vm129, %v142, 0.0
    %v147 = vsel %vm130, %v142, 0.0
    %v148 = vsel %vm131, %v142, 0.0
    %v149 = vsel %vm132, %v142, 0.0
    %v150 = vsel %vm133, %v142, 0.0
    %v151 = vsel %vm134, %v142, 0.0
    %v152 = vsel %vm135, %v142, 0.0
    %v153 = vsel %vm136, %v142, 0.0
    %v154 = vsel %vm137, %v142, 0.0
    %v155 = vadd.s32 %v120, %v119
    %v156 = vlaneseq
    %v157 = vshrl.u32 %v156, 7
    %v158 = vsub.s32 0, %v157
    %v159 = vrot.slane %v155, %v158
    %vm160 = vcmp.eq.s32.totalorder %v80, %v159
    %vm161 = vcmp.eq.s32.totalorder %v81, %v159
    %vm162 = vcmp.eq.s32.totalorder %v82, %v159
    %vm163 = vcmp.eq.s32.totalorder %v83, %v159
    %vm164 = vcmp.eq.s32.totalorder %v84, %v159
    %vm165 = vcmp.eq.s32.totalorder %v85, %v159
    %vm166 = vcmp.eq.s32.totalorder %v86, %v159
    %vm167 = vcmp.eq.s32.totalorder %v87, %v159
    %vm168 = vcmp.eq.s32.totalorder %v88, %v159
    %vm169 = vcmp.eq.s32.totalorder %v89, %v159
    %vm170 = vcmp.eq.s32.totalorder %v90, %v159
    %vm171 = vcmp.eq.s32.totalorder %v91, %v159
    %v172 = vlaneseq
    %v173 = vshrl.u32 %v172, 7
    %v174 = vsub.s32 0, %v173
    %v175 = vrot.slane %v99, %v174
    %v176 = vsel %vm160, %v175, 0.0
    %v177 = vsel %vm161, %v175, 0.0
    %v178 = vsel %vm162, %v175, 0.0
    %v179 = vsel %vm163, %v175, 0.0
    %v180 = vsel %vm164, %v175, 0.0
    %v181 = vsel %vm165, %v175, 0.0
    %v182 = vsel %vm166, %v175, 0.0
    %v183 = vsel %vm167, %v175, 0.0
    %v184 = vsel %vm168, %v175, 0.0
    %v185 = vsel %vm169, %v175, 0.0
    %v186 = vsel %vm170, %v175, 0.0
    %v187 = vsel %vm171, %v175, 0.0
    %v188 = vadd.f32 %v143, %v176
    %v189 = vadd.f32 %v144, %v177
    %v190 = vadd.f32 %v145, %v178
    %v191 = vadd.f32 %v146, %v179
    %v192 = vadd.f32 %v147, %v180
    %v193 = vadd.f32 %v148, %v181
    %v194 = vadd.f32 %v149, %v182
    %v195 = vadd.f32 %v150, %v183
    %v196 = vadd.f32 %v151, %v184
    %v197 = vadd.f32 %v152, %v185
    %v198 = vadd.f32 %v153, %v186
    %v199 = vadd.f32 %v154, %v187
    %v200 = vpack.c.bf16 %v189, %v188
    %v201 = vpack.c.bf16 %v191, %v190
    %v202 = vpack.c.bf16 %v193, %v192
    %v203 = vpack.c.bf16 %v195, %v194
    %v204 = vpack.c.bf16 %v197, %v196
    %v205 = vpack.c.bf16 %v199, %v198
    %v206 = vlaneseq
    %v207 = vshrl.u32 %v206, 7
    %v208 = vsub.s32 0, %v207
    %v209 = vrot.slane %v105, %v208
    %vm210 = vcmp.eq.s32.totalorder %v80, %v209
    %vm211 = vcmp.eq.s32.totalorder %v81, %v209
    %v212 = vsub.f32 1.0, %v98
    %v213 = vlaneseq
    %v214 = vshrl.u32 %v213, 7
    %v215 = vsub.s32 0, %v214
    %v216 = vrot.slane %v212, %v215
    %v217 = vsel %vm210, %v216, 0.0
    %v218 = vsel %vm211, %v216, 0.0
    %v219 = vlaneseq
    %v220 = vshrl.u32 %v219, 7
    %v221 = vsub.s32 0, %v220
    %v222 = vrot.slane %v110, %v221
    %vm223 = vcmp.eq.s32.totalorder %v80, %v222
    %vm224 = vcmp.eq.s32.totalorder %v81, %v222
    %v225 = vlaneseq
    %v226 = vshrl.u32 %v225, 7
    %v227 = vsub.s32 0, %v226
    %v228 = vrot.slane %v98, %v227
    %v229 = vsel %vm223, %v228, 0.0
    %v230 = vsel %vm224, %v228, 0.0
    %v231 = vadd.f32 %v217, %v229
    %v232 = vadd.f32 %v218, %v230
    %v233 = vld [vmem:[%s1] sm:$0xf]
    %v234 = vld [vmem:[%s1 + $0x4] sm:$0xf]
    %v235 = vld [vmem:[%s1 + $0x8] sm:$0xf]
    %v236 = vld [vmem:[%s1 + $0xc] sm:$0xf]
    %v237 = vld [vmem:[%s1 + $0x10] sm:$0xf]
    %v238 = vld [vmem:[%s1 + $0x14] sm:$0xf]
    %v239 = vld [vmem:[%s1 + $0x18] sm:$0xf]
    %v240 = vld [vmem:[%s1 + $0x1c] sm:$0xf]
    %v241 = vld [vmem:[%s1 + $0x20] sm:$0xf]
    %v242 = vld [vmem:[%s1 + $0x24] sm:$0xf]
    %v243 = vld [vmem:[%s1 + $0x28] sm:$0xf]
    %v244 = vld [vmem:[%s1 + $0x2c] sm:$0xf]
    %v245 = vld [vmem:[%s1 + $0x30] sm:$0xf]
    %v246 = vld [vmem:[%s1 + $0x34] sm:$0xf]
    %v247 = vld [vmem:[%s1 + $0x38] sm:$0xf]
    %v248 = vld [vmem:[%s1 + $0x3c] sm:$0xf]
    %v265 = vunpack.c.l.b16 %v233
    %v266 = vunpack.c.l.b16 %v234
    %v267 = vunpack.c.l.b16 %v235
    %v268 = vunpack.c.l.b16 %v236
    %v269 = vunpack.c.l.b16 %v237
    %v270 = vunpack.c.l.b16 %v238
    %v271 = vunpack.c.l.b16 %v239
    %v272 = vunpack.c.l.b16 %v240
    %v273 = vunpack.c.l.b16 %v241
    %v274 = vunpack.c.l.b16 %v242
    %v275 = vunpack.c.l.b16 %v243
    %v276 = vunpack.c.l.b16 %v244
    %v277 = vunpack.c.l.b16 %v245
    %v278 = vunpack.c.l.b16 %v246
    %v279 = vunpack.c.l.b16 %v247
    %v280 = vunpack.c.l.b16 %v248
    %v281 = vpack.c.b16 %v266, %v265
    %v282 = vpack.c.b16 %v268, %v267
    %v283 = vpack.c.b16 %v270, %v269
    %v284 = vpack.c.b16 %v272, %v271
    %v285 = vpack.c.b16 %v274, %v273
    %v286 = vpack.c.b16 %v276, %v275
    %v287 = vpack.c.b16 %v278, %v277
    %v288 = vpack.c.b16 %v280, %v279
    %vm289 = vcmask 785408
    %v291 = vsel %vm289, %v281, 0
    %v294 = vsel %vm289, %v282, 0
    %v297 = vsel %vm289, %v283, 0
    %v300 = vsel %vm289, %v284, 0
    %v303 = vsel %vm289, %v285, 0
    %v306 = vsel %vm289, %v286, 0
    %v309 = vsel %vm289, %v287, 0
    %v312 = vsel %vm289, %v288, 0
    %314 = vmatprep.subr.bf16.mxu0 0
    %315 = vmatpush1.bf16.msra.mxu0 %v200
    %316 = vmatprep.subr.bf16.mxu0 0
    %317 = vmatpush1.bf16.msra.mxu0 %v201
    %318 = vmatprep.subr.bf16.mxu0 0
    %319 = vmatpush1.bf16.msra.mxu0 %v202
    %320 = vmatprep.subr.bf16.mxu0 0
    %321 = vmatpush1.bf16.msra.mxu0 %v203
    %322 = vmatprep.subr.bf16.mxu0 0
    %323 = vmatpush1.bf16.msra.mxu0 %v204
    %324 = vmatprep.subr.bf16.mxu0 0
    %325 = vmatpush1.bf16.msra.mxu0 %v205
    %326 = vmatprep.subr.bf16.mxu0 0
    %327 = vmatpush1.bf16.msra.mxu0 0
    %328 = vmatprep.subr.bf16.mxu0 0
    %329 = vmatpush1.bf16.msra.mxu0 0
    %330 = vmatprep.subr.bf16.mxu0 0
    %331 = vmatpush1.bf16.msra.mxu0 0
    %332 = vmatprep.subr.bf16.mxu0 0
    %333 = vmatpush1.bf16.msra.mxu0 0
    %334 = vmatprep.subr.bf16.mxu0 0
    %335 = vmatpush1.bf16.msra.mxu0 0
    %336 = vmatprep.subr.bf16.mxu0 0
    %337 = vmatpush1.bf16.msra.mxu0 0
    %338 = vmatprep.subr.bf16.mxu0 0
    %339 = vmatpush1.bf16.msra.mxu0 0
    %340 = vmatprep.subr.bf16.mxu0 0
    %341 = vmatpush1.bf16.msra.mxu0 0
    %342 = vmatprep.subr.bf16.mxu0 0
    %343 = vmatpush1.bf16.msra.mxu0 0
    %344 = vmatprep.subr.bf16.mxu0 0
    %345 = vmatpush1.bf16.msra.mxu0 0
    %346 = vmatprep.mubr.bf16.mxu0 0
    %347 = vmatmul.mubr.bf16.gmra.mrb[0].mxu0 %v291
    %v348 = vpop.f32.mrb[0].mxu0
    %v349 = vadd.f32 0.0, %v348
    %v350 = vpop.f32.mrb[0].mxu0
    %v351 = vpop.f32.mrb[0].mxu0
    %v352 = vadd.f32 0.0, %v351
    %v353 = vpop.f32.mrb[0].mxu0
    %354 = vmatprep.mubr.bf16.mxu0 0
    %355 = vmatmul.mubr.bf16.gmra.mrb[0].mxu0 %v294
    %v356 = vpop.f32.mrb[0].mxu0
    %v357 = vadd.f32 0.0, %v356
    %v358 = vpop.f32.mrb[0].mxu0
    %v359 = vpop.f32.mrb[0].mxu0
    %v360 = vadd.f32 0.0, %v359
    %v361 = vpop.f32.mrb[0].mxu0
    %362 = vmatprep.mubr.bf16.mxu0 0
    %363 = vmatmul.mubr.bf16.gmra.mrb[0].mxu0 %v297
    %v364 = vpop.f32.mrb[0].mxu0
    %v365 = vadd.f32 0.0, %v364
    %v366 = vpop.f32.mrb[0].mxu0
    %v367 = vpop.f32.mrb[0].mxu0
    %v368 = vadd.f32 0.0, %v367
    %v369 = vpop.f32.mrb[0].mxu0
    %370 = vmatprep.mubr.bf16.mxu0 0
    %371 = vmatmul.mubr.bf16.gmra.mrb[0].mxu0 %v300
    %v372 = vpop.f32.mrb[0].mxu0
    %v373 = vadd.f32 0.0, %v372
    %v374 = vpop.f32.mrb[0].mxu0
    %v375 = vpop.f32.mrb[0].mxu0
    %v376 = vadd.f32 0.0, %v375
    %v377 = vpop.f32.mrb[0].mxu0
    %378 = vmatprep.mubr.bf16.mxu0 0
    %379 = vmatmul.mubr.bf16.gmra.mrb[0].mxu0 %v303
    %v380 = vpop.f32.mrb[0].mxu0
    %v381 = vadd.f32 0.0, %v380
    %v382 = vpop.f32.mrb[0].mxu0
    %v383 = vpop.f32.mrb[0].mxu0
    %v384 = vadd.f32 0.0, %v383
    %v385 = vpop.f32.mrb[0].mxu0
    %386 = vmatprep.mubr.bf16.mxu0 0
    %387 = vmatmul.mubr.bf16.gmra.mrb[0].mxu0 %v306
    %v388 = vpop.f32.mrb[0].mxu0
    %v389 = vadd.f32 0.0, %v388
    %v390 = vpop.f32.mrb[0].mxu0
    %v391 = vpop.f32.mrb[0].mxu0
    %v392 = vadd.f32 0.0, %v391
    %v393 = vpop.f32.mrb[0].mxu0
    %394 = vmatprep.mubr.bf16.mxu0 0
    %395 = vmatmul.mubr.bf16.gmra.mrb[0].mxu0 %v309
    %v396 = vpop.f32.mrb[0].mxu0
    %v397 = vadd.f32 0.0, %v396
    %v398 = vpop.f32.mrb[0].mxu0
    %v399 = vpop.f32.mrb[0].mxu0
    %v400 = vadd.f32 0.0, %v399
    %v401 = vpop.f32.mrb[0].mxu0
    %402 = vmatprep.mubr.bf16.mxu0 0
    %403 = vmatmul.mubr.bf16.gmra.mrb[0].mxu0 %v312
    %v404 = vpop.f32.mrb[0].mxu0
    %v405 = vadd.f32 0.0, %v404
    %v406 = vpop.f32.mrb[0].mxu0
    %v407 = vpop.f32.mrb[0].mxu0
    %v408 = vadd.f32 0.0, %v407
    %v409 = vpop.f32.mrb[0].mxu0
    %410 = vdwg.mxu0
    %v411 = vmul.f32 %v349, %v231
    %v412 = vmul.f32 %v352, %v232
    %v413 = vmul.f32 %v357, %v231
    %v414 = vmul.f32 %v360, %v232
    %v415 = vmul.f32 %v365, %v231
    %v416 = vmul.f32 %v368, %v232
    %v417 = vmul.f32 %v373, %v231
    %v418 = vmul.f32 %v376, %v232
    %v419 = vmul.f32 %v381, %v231
    %v420 = vmul.f32 %v384, %v232
    %v421 = vmul.f32 %v389, %v231
    %v422 = vmul.f32 %v392, %v232
    %v423 = vmul.f32 %v397, %v231
    %v424 = vmul.f32 %v400, %v232
    %v425 = vmul.f32 %v405, %v231
    %v426 = vmul.f32 %v408, %v232
    %v427 = vadd.f32 %v411, %v412
    %v428 = vrot.slane %v427, 4
    %v429 = vadd.f32 %v427, %v428
    %v430 = vrot.slane %v429, 2
    %v431 = vadd.f32 %v429, %v430
    %v432 = vrot.slane %v431, 1
    %v433 = vadd.f32 %v431, %v432
    %v434 = vadd.f32 %v413, %v414
    %v435 = vrot.slane %v434, 4
    %v436 = vadd.f32 %v434, %v435
    %v437 = vrot.slane %v436, 2
    %v438 = vadd.f32 %v436, %v437
    %v439 = vrot.slane %v438, 1
    %v440 = vadd.f32 %v438, %v439
    %v441 = vadd.f32 %v415, %v416
    %v442 = vrot.slane %v441, 4
    %v443 = vadd.f32 %v441, %v442
    %v444 = vrot.slane %v443, 2
    %v445 = vadd.f32 %v443, %v444
    %v446 = vrot.slane %v445, 1
    %v447 = vadd.f32 %v445, %v446
    %v448 = vadd.f32 %v417, %v418
    %v449 = vrot.slane %v448, 4
    %v450 = vadd.f32 %v448, %v449
    %v451 = vrot.slane %v450, 2
    %v452 = vadd.f32 %v450, %v451
    %v453 = vrot.slane %v452, 1
    %v454 = vadd.f32 %v452, %v453
    %v455 = vadd.f32 %v419, %v420
    %v456 = vrot.slane %v455, 4
    %v457 = vadd.f32 %v455, %v456
    %v458 = vrot.slane %v457, 2
    %v459 = vadd.f32 %v457, %v458
    %v460 = vrot.slane %v459, 1
    %v461 = vadd.f32 %v459, %v460
    %v462 = vadd.f32 %v421, %v422
    %v463 = vrot.slane %v462, 4
    %v464 = vadd.f32 %v462, %v463
    %v465 = vrot.slane %v464, 2
    %v466 = vadd.f32 %v464, %v465
    %v467 = vrot.slane %v466, 1
    %v468 = vadd.f32 %v466, %v467
    %v469 = vadd.f32 %v423, %v424
    %v470 = vrot.slane %v469, 4
    %v471 = vadd.f32 %v469, %v470
    %v472 = vrot.slane %v471, 2
    %v473 = vadd.f32 %v471, %v472
    %v474 = vrot.slane %v473, 1
    %v475 = vadd.f32 %v473, %v474
    %v476 = vadd.f32 %v425, %v426
    %v477 = vrot.slane %v476, 4
    %v478 = vadd.f32 %v476, %v477
    %v479 = vrot.slane %v478, 2
    %v480 = vadd.f32 %v478, %v479
    %v481 = vrot.slane %v480, 1
    %v482 = vadd.f32 %v480, %v481
    %v483 = vld [vmem:[%s2] sm:$0xff]
    %v484 = vsel %vm33, 1, 0
    %v485 = vlaneseq
    %v486 = vshrl.u32 %v485, 7
    %v487 = vsub.s32 0, %v486
    %v488 = vrot.slane %v484, %v487
    %vm489 = vcmp.eq.s32.totalorder %v488, 1
    %491 = vset.pattern.permute.xlu0 0
    %492 = vperm.xlu0 %491, %v483
    %v493 = vpop.permute.xlu0 %492
    %vm503 = vcmask 1041409
    %v504 = vsel %vm503, %v440, %v433
    %vm505 = vcmask 1042434
    %v506 = vsel %vm505, %v447, %v504
    %vm507 = vcmask 1043459
    %v508 = vsel %vm507, %v454, %v506
    %vm509 = vcmask 1044484
    %v510 = vsel %vm509, %v461, %v508
    %vm511 = vcmask 1045509
    %v512 = vsel %vm511, %v468, %v510
    %vm513 = vcmask 1046534
    %v514 = vsel %vm513, %v475, %v512
    %vm515 = vcmask 1047559
    %v516 = vsel %vm515, %v482, %v514
    %v518 = vsel %vm489, %v493, %v516
    %519 = vst [vmem:[#allocation2] sm:$0xff] %v518
    // Predicated region
    $region14: #{tpu_custom_call.1} parent=1 // pred_check
      _
    $region15: #{tpu_custom_call.1} parent=1 // pred_check_branch
      %521 = sbr.rel (0) target = $region17
    $region16: #{tpu_custom_call.1} parent=1 // pred_region
      %s523 = ssub.s32 128, 128
      %524 = vsyncadd [#allocation3], %s523
      %s526 = sshll.u32 [#allocation2], 4
      %s527 = int_to_ptr.vmem [resolvable:$true] %s526
      %529 = dma.vmem_to_hbm [thread:$0]  %s527, 128, %s3, [#allocation3]
    $region17: #{tpu_custom_call.1} parent=1 // pred_fallthru
      _
    // Predicated region
    $region18: #{tpu_custom_call.1} parent=1 // pred_check
      _
    $region19: #{tpu_custom_call.1} parent=1 // pred_check_branch
      %531 = sbr.rel (0) target = $region21
    $region20: #{tpu_custom_call.1} parent=1 // pred_region
      %532 = dma.done [#allocation3], 128
    $region21: #{tpu_custom_call.1} parent=1 // pred_fallthru
      _
    %533 = vsyncpa [#allocation3], 1

</llo_original>
